<compile_context>
chip_gen: v6e
topology: v6e:2x2x1
jax: 0.10.0
libtpu: 0.0.40
codegen_flags: <defaults>
</compile_context>

<pallas_src>
import functools
import jax
import jax.numpy as jnp
from jax.experimental import pallas as pl
from jax.experimental.pallas import tpu as pltpu

LN_EPS = 1e-12                      # BERT/FLAVA LayerNorm epsilon
# Scoped VMEM budget: sized for v7x (64 MiB physical); on v5e/v6e (128 MiB)
# this can be raised to ~96 MiB for deeper pipelining of the weight blocks.
VMEM_LIMIT = 48 * 1024 * 1024


def _layernorm(x, g, b):
    mu = jnp.mean(x, axis=-1, keepdims=True)
    var = jnp.mean(jnp.square(x - mu), axis=-1, keepdims=True)
    return (x - mu) * jax.lax.rsqrt(var + LN_EPS) * g + b


def _pad_seq_len(s0):
    # Lane-dense padding: real workloads go to a multiple of 128 (245 -> 256);
    # tiny demo sequences only need a multiple of 16 (bf16 sublane packing).
    if s0 <= 16:
        return 16
    return ((s0 + 127) // 128) * 128


# --------------------------------------------------------------------------
# Kernel 1: embedding sum + LayerNorm  (per-batch grid)
# --------------------------------------------------------------------------
def embed_ln_kernel(we_ref, te_ref, pe_ref, g_ref, b_ref, out_ref):
    x = we_ref[0] + te_ref[0] + pe_ref[...]              # (S, H) f32
    out_ref[0] = _layernorm(x, g_ref[...], b_ref[...]).astype(out_ref.dtype)


# --------------------------------------------------------------------------
# Kernel 2: ALL encoder layers in one call.  Grid = (B, num_layers);
# the layer axis is "arbitrary" so next-layer weights prefetch behind the
# current layer's compute; the activation is carried in a VMEM scratch.
# --------------------------------------------------------------------------
def encoder_stack_kernel(nh,
                         x_in_ref, bias_ref,
                         wqkv_ref, bqkv_ref, wo_ref, bo_ref,
                         g1_ref, be1_ref, w1_ref, b1_ref, w2_ref, b2_ref,
                         g2_ref, be2_ref,
                         out_ref,
                         act_scr, qkv_scr, ff_scr):
    l = pl.program_id(1)
    n_layers = pl.num_programs(1)

    # Layer 0 of each batch: load the embedding output into the carry.
    @pl.when(l == 0)
    def _():
        act_scr[...] = x_in_ref[0]

    x = act_scr[...]                                      # (S, H) bf16
    S, H = x.shape
    hd = H // nh
    xf = x.astype(jnp.float32)                            # f32 copy for residuals
    bias = bias_ref[0]                                    # (1, S) f32 additive key mask

    # ---- Fused QKV projection: one lane-dense bf16 matmul, f32 accumulate.
    # 1/sqrt(hd) is already folded into the Q columns of wqkv/bqkv.
    qkv = jnp.dot(x, wqkv_ref[0], preferred_element_type=jnp.float32) + bqkv_ref[0]
    qkv_scr[...] = qkv.astype(jnp.bfloat16)               # (S, 3H) bf16, single cast

    def to_heads(cols):                                   # (S, H) -> (nh, S, hd)
        return jnp.transpose(cols.reshape(S, nh, hd), (1, 0, 2))

    q = to_heads(qkv_scr[:, 0:H])
    k = to_heads(qkv_scr[:, H:2 * H])
    v = to_heads(qkv_scr[:, 2 * H:3 * H])

    # ---- Batched attention over all heads (f32 scores / softmax).
    s = jnp.einsum('nqd,nkd->nqk', q, k,
                   preferred_element_type=jnp.float32)    # (nh, S, S)
    s = s + bias                                          # one masked add for all heads
    s = s - jnp.max(s, axis=-1, keepdims=True)
    p = jnp.exp(s)
    p = p * pl.reciprocal(jnp.sum(p, axis=-1, keepdims=True), approx=True)
    ctx = jnp.einsum('nqk,nkd->nqd', p.astype(jnp.bfloat16), v,
                     preferred_element_type=jnp.float32)  # (nh, S, hd)

    # ---- Output projection: merge heads back to (S, H), one (H,H) matmul.
    ctx2 = jnp.transpose(ctx.astype(jnp.bfloat16), (1, 0, 2)).reshape(S, H)
    attn_out = jnp.dot(ctx2, wo_ref[0],
                       preferred_element_type=jnp.float32) + bo_ref[0]
    h1 = _layernorm(xf + attn_out, g1_ref[0], be1_ref[0])      # f32

    # ---- Feed-forward; intermediate parked in bf16 VMEM scratch.
    ff = jnp.dot(h1.astype(jnp.bfloat16), w1_ref[0],
                 preferred_element_type=jnp.float32) + b1_ref[0]
    # TODO(synk): HF FLAVA uses exact (erf) GELU; tanh approximation used here.
    ff_scr[...] = jax.nn.gelu(ff, approximate=True).astype(jnp.bfloat16)
    ff2 = jnp.dot(ff_scr[...], w2_ref[0],
                  preferred_element_type=jnp.float32) + b2_ref[0]

    y = _layernorm(h1 + ff2, g2_ref[0], be2_ref[0]).astype(jnp.bfloat16)
    act_scr[...] = y                                      # carry to next layer

    @pl.when(l == n_layers - 1)
    def _():
        out_ref[0] = y


# --------------------------------------------------------------------------
# Wrappers
# --------------------------------------------------------------------------
def _bcast_spec(shape):
    n = len(shape)
    return pl.BlockSpec(shape, lambda b, _n=n: (0,) * _n)


def run_embeddings(word_e, type_e, pos_e, gamma, beta):
    B, S, H = word_e.shape
    return pl.pallas_call(
        embed_ln_kernel,
        out_shape=jax.ShapeDtypeStruct((B, S, H), jnp.bfloat16),
        grid=(B,),
        in_specs=[
            pl.BlockSpec((1, S, H), lambda b: (b, 0, 0)),
            pl.BlockSpec((1, S, H), lambda b: (b, 0, 0)),
            _bcast_spec((S, H)),
            _bcast_spec((1, H)),
            _bcast_spec((1, H)),
        ],
        out_specs=pl.BlockSpec((1, S, H), lambda b: (b, 0, 0)),
        compiler_params=pltpu.CompilerParams(
            dimension_semantics=("parallel",),
            vmem_limit_bytes=VMEM_LIMIT),
    )(word_e, type_e, pos_e, gamma, beta)


def run_encoder_stack(x, bias, p, nh):
    B, S, H = x.shape
    L = p["wqkv"].shape[0]
    I = p["w1"].shape[2]
    H3 = 3 * H

    def _lspec(d1, d2):
        # one layer's block of a (L, d1, d2) stacked parameter
        return pl.BlockSpec((1, d1, d2), lambda b, l: (l, 0, 0))

    in_specs = [
        pl.BlockSpec((1, S, H), lambda b, l: (b, 0, 0)),   # embedding output (bf16)
        pl.BlockSpec((1, 1, S), lambda b, l: (b, 0, 0)),   # additive key bias (f32)
        _lspec(H, H3), _lspec(1, H3),                      # wqkv, bqkv
        _lspec(H, H),  _lspec(1, H),                       # wo, bo
        _lspec(1, H),  _lspec(1, H),                       # ln1 gamma/beta
        _lspec(H, I),  _lspec(1, I),                       # w1, b1
        _lspec(I, H),  _lspec(1, H),                       # w2, b2
        _lspec(1, H),  _lspec(1, H),                       # ln2 gamma/beta
    ]
    # NOTE: at full FLAVA scale (H=768, I=3072, S=256) bf16 weights are
    # ~14 MB/layer; with default double-buffering on the streamed weight
    # blocks plus the f32 attention intermediates this sits under the
    # 48 MiB budget.  On v7x with B=1 add a query-tile "parallel" axis so
    # both TensorCores are used.
    return pl.pallas_call(
        functools.partial(encoder_stack_kernel, nh),
        out_shape=jax.ShapeDtypeStruct((B, S, H), jnp.bfloat16),
        grid=(B, L),
        in_specs=in_specs,
        out_specs=pl.BlockSpec((1, S, H), lambda b, l: (b, 0, 0)),
        scratch_shapes=[
            pltpu.VMEM((S, H), jnp.bfloat16),    # activation carried across layers
            pltpu.VMEM((S, H3), jnp.bfloat16),   # fused QKV
            pltpu.VMEM((S, I), jnp.bfloat16),    # FFN intermediate
        ],
        compiler_params=pltpu.CompilerParams(
            dimension_semantics=("parallel", "arbitrary"),
            vmem_limit_bytes=VMEM_LIMIT),
    )(x, bias,
      p["wqkv"], p["bqkv"], p["wo"], p["bo"], p["ln1_g"], p["ln1_b"],
      p["w1"], p["b1"], p["w2"], p["b2"], p["ln2_g"], p["ln2_b"])


def text_encoder_forward(input_ids, token_type_ids, attention_mask, params):
    """Returns text_features of shape [B, H] (the CLS hidden vector), f32."""
    B, S0 = input_ids.shape
    S = _pad_seq_len(S0)
    if S != S0:
        pad = ((0, 0), (0, S - S0))
        input_ids = jnp.pad(input_ids, pad)
        token_type_ids = jnp.pad(token_type_ids, pad)
        attention_mask = jnp.pad(attention_mask, pad)   # padded keys get masked out

    # glue: embedding gathers (f32 tables)
    we = jnp.take(params["word_emb"], input_ids, axis=0)        # (B, S, H)
    te = jnp.take(params["type_emb"], token_type_ids, axis=0)   # (B, S, H)
    pe = params["pos_emb"][:S]                                  # (S, H)
    x = run_embeddings(we, te, pe, params["emb_ln_g"], params["emb_ln_b"])

    # additive key-mask bias precomputed once per call; kept in f32.
    bias = ((attention_mask.astype(jnp.float32) - 1.0) * 1e9).reshape(B, 1, S)

    x = run_encoder_stack(x, bias, params, params["num_heads"])
    return x[:, 0, :].astype(jnp.float32)                       # [B, H] (CLS)


# --------------------------------------------------------------------------
# Deterministic parameter construction (synthetic, small config).
# Weights are handed off in fused / layer-stacked bf16 form:
#   wqkv [L, H, 3H]  (Q columns pre-scaled by 1/sqrt(head_dim)),
#   wo   [L, H, H],  w1 [L, H, I],  w2 [L, I, H];  biases / LN params f32.
# --------------------------------------------------------------------------
def make_params(key, vocab, max_pos, type_vocab, H, I, num_layers, num_heads):
    hd = H // num_heads
    q_scale = 1.0 / float(hd) ** 0.5

    def nrm(k, shape):
        return jax.random.normal(k, shape, jnp.float32) * 0.02

    keys = jax.random.split(key, 4 + num_layers)
    params = {
        "word_emb": nrm(keys[0], (vocab, H)),
        "pos_emb": nrm(keys[1], (max_pos, H)),
        "type_emb": nrm(keys[2], (type_vocab, H)),
        "emb_ln_g": jnp.ones((1, H), jnp.float32),
        "emb_ln_b": jnp.zeros((1, H), jnp.float32),
        "num_heads": num_heads,
    }

    names = ["wqkv", "bqkv", "wo", "bo", "ln1_g", "ln1_b",
             "w1", "b1", "w2", "b2", "ln2_g", "ln2_b"]
    acc = {n: [] for n in names}
    zH = jnp.zeros((1, H), jnp.float32)
    for li in range(num_layers):
        lk = jax.random.split(keys[4 + li], 6)
        wq, wk, wv, wo = (nrm(lk[i], (H, H)) for i in range(4))   # [in, out] layout
        # Fold 1/sqrt(head_dim) into the Q projection (weights + bias).
        acc["wqkv"].append(jnp.concatenate([wq * q_scale, wk, wv], axis=1)
                           .astype(jnp.bfloat16))                  # (H, 3H)
        acc["bqkv"].append(jnp.concatenate([zH * q_scale, zH, zH], axis=1))  # (1, 3H)
        acc["wo"].append(wo.astype(jnp.bfloat16))
        acc["bo"].append(zH)
        acc["ln1_g"].append(jnp.ones((1, H), jnp.float32))
        acc["ln1_b"].append(zH)
        acc["w1"].append(nrm(lk[4], (H, I)).astype(jnp.bfloat16))
        acc["b1"].append(jnp.zeros((1, I), jnp.float32))
        acc["w2"].append(nrm(lk[5], (I, H)).astype(jnp.bfloat16))
        acc["b2"].append(zH)
        acc["ln2_g"].append(jnp.ones((1, H), jnp.float32))
        acc["ln2_b"].append(zH)

    for n in names:
        params[n] = jnp.stack(acc[n], axis=0)
    return params


if __name__ == "__main__":
    # small, lane/sublane-aligned config consistent with the module's structure
    B, S = 2, 8            # (FLAVA pads to max_length=245 -> 256; shrunk for the demo)
    H, I = 128, 512        # hidden / intermediate (FLAVA: 768 / 3072), multiples of 128
    NUM_LAYERS, NUM_HEADS = 2, 4
    VOCAB, MAX_POS, TYPE_VOCAB = 50, 64, 2

    key = jax.random.PRNGKey(0)
    pkey, ikey = jax.random.split(key)
    params = make_params(pkey, VOCAB, MAX_POS, TYPE_VOCAB, H, I,
                         NUM_LAYERS, NUM_HEADS)

    input_ids = jax.random.randint(ikey, (B, S), 0, VOCAB, dtype=jnp.int32)
    token_type_ids = jnp.zeros((B, S), jnp.int32)
    attention_mask = jnp.ones((B, S), jnp.int32)

    feats = text_encoder_forward(input_ids, token_type_ids, attention_mask, params)
    feats = jax.block_until_ready(feats)
    assert feats.shape == (B, H) and feats.dtype == jnp.float32
    assert bool(jnp.all(jnp.isfinite(feats)))
    print("KERNEL_OK")
</pallas_src>

<mosaic_0001>
module attributes {stable_mosaic.version = 11 : i64} {
  func.func @embed_ln_kernel(%arg0: i32, %arg1: memref<1x16x128xf32, #tpu.memory_space<vmem>>, %arg2: memref<1x16x128xf32, #tpu.memory_space<vmem>>, %arg3: memref<16x128xf32, #tpu.memory_space<vmem>>, %arg4: memref<1x128xf32, #tpu.memory_space<vmem>>, %arg5: memref<1x128xf32, #tpu.memory_space<vmem>>, %arg6: memref<1x16x128xbf16, #tpu.memory_space<vmem>>) attributes {dimension_semantics = [#tpu.dimension_semantics<parallel>], iteration_bounds = array<i64: 2>, scalar_prefetch = 0 : i64, scratch_operands = 0 : i64, tpu.core_type = #tpu.core_type<tc>, window_params = [{transform_indices = @transform_0, window_bounds = array<i64: 1, 16, 128>}, {transform_indices = @transform_1, window_bounds = array<i64: 1, 16, 128>}, {pipeline_mode = #tpu.pipeline_mode<synchronous>, transform_indices = @transform_2, window_bounds = array<i64: 16, 128>}, {pipeline_mode = #tpu.pipeline_mode<synchronous>, transform_indices = @transform_3, window_bounds = array<i64: 1, 128>}, {pipeline_mode = #tpu.pipeline_mode<synchronous>, transform_indices = @transform_4, window_bounds = array<i64: 1, 128>}, {transform_indices = @transform_5, window_bounds = array<i64: 1, 16, 128>}]} {
    %c0 = arith.constant 0 : index
    %c0_0 = arith.constant 0 : index
    %c0_1 = arith.constant 0 : index
    %0 = vector.load %arg1[%c0, %c0_0, %c0_1] : memref<1x16x128xf32, #tpu.memory_space<vmem>>, vector<1x16x128xf32>
    %1 = vector.shape_cast %0 : vector<1x16x128xf32> to vector<16x128xf32>
    %c0_2 = arith.constant 0 : index
    %c0_3 = arith.constant 0 : index
    %c0_4 = arith.constant 0 : index
    %2 = vector.load %arg2[%c0_2, %c0_3, %c0_4] : memref<1x16x128xf32, #tpu.memory_space<vmem>>, vector<1x16x128xf32>
    %3 = vector.shape_cast %2 : vector<1x16x128xf32> to vector<16x128xf32>
    %4 = arith.addf %1, %3 : vector<16x128xf32>
    %c0_5 = arith.constant 0 : index
    %c0_6 = arith.constant 0 : index
    %5 = vector.load %arg3[%c0_5, %c0_6] : memref<16x128xf32, #tpu.memory_space<vmem>>, vector<16x128xf32>
    %6 = arith.addf %4, %5 : vector<16x128xf32>
    %c0_7 = arith.constant 0 : index
    %c0_8 = arith.constant 0 : index
    %7 = vector.load %arg4[%c0_7, %c0_8] : memref<1x128xf32, #tpu.memory_space<vmem>>, vector<1x128xf32>
    %c0_9 = arith.constant 0 : index
    %c0_10 = arith.constant 0 : index
    %8 = vector.load %arg5[%c0_9, %c0_10] : memref<1x128xf32, #tpu.memory_space<vmem>>, vector<1x128xf32>
    %cst = arith.constant dense<0.000000e+00> : vector<16xf32>
    %9 = vector.multi_reduction <add>, %6, %cst [1] : vector<16x128xf32> to vector<16xf32>
    %10 = vector.shape_cast %9 : vector<16xf32> to vector<16x1xf32>
    %cst_11 = arith.constant 1.280000e+02 : f32
    %11 = vector.broadcast %cst_11 : f32 to vector<16x1xf32>
    %12 = arith.divf %10, %11 : vector<16x1xf32>
    %13 = vector.broadcast %12 : vector<16x1xf32> to vector<16x128xf32>
    %14 = arith.subf %6, %13 : vector<16x128xf32>
    %15 = arith.mulf %14, %14 : vector<16x128xf32>
    %cst_12 = arith.constant dense<0.000000e+00> : vector<16xf32>
    %16 = vector.multi_reduction <add>, %15, %cst_12 [1] : vector<16x128xf32> to vector<16xf32>
    %17 = vector.shape_cast %16 : vector<16xf32> to vector<16x1xf32>
    %cst_13 = arith.constant 1.280000e+02 : f32
    %18 = vector.broadcast %cst_13 : f32 to vector<16x1xf32>
    %19 = arith.divf %17, %18 : vector<16x1xf32>
    %20 = vector.broadcast %12 : vector<16x1xf32> to vector<16x128xf32>
    %21 = arith.subf %6, %20 : vector<16x128xf32>
    %cst_14 = arith.constant 9.99999996E-13 : f32
    %22 = vector.broadcast %cst_14 : f32 to vector<16x1xf32>
    %23 = arith.addf %19, %22 : vector<16x1xf32>
    %24 = math.rsqrt %23 : vector<16x1xf32>
    %25 = vector.broadcast %24 : vector<16x1xf32> to vector<16x128xf32>
    %26 = arith.mulf %21, %25 : vector<16x128xf32>
    %27 = vector.broadcast %7 : vector<1x128xf32> to vector<16x128xf32>
    %28 = arith.mulf %26, %27 : vector<16x128xf32>
    %29 = vector.broadcast %8 : vector<1x128xf32> to vector<16x128xf32>
    %30 = arith.addf %28, %29 : vector<16x128xf32>
    %31 = arith.truncf %30 : vector<16x128xf32> to vector<16x128xbf16>
    %c0_15 = arith.constant 0 : index
    %c0_16 = arith.constant 0 : index
    %c0_17 = arith.constant 0 : index
    %32 = vector.load %arg6[%c0_15, %c0_16, %c0_17] : memref<1x16x128xbf16, #tpu.memory_space<vmem>>, vector<1x16x128xbf16>
    %33 = vector.shape_cast %32 : vector<1x16x128xbf16> to vector<16x128xbf16>
    %34 = vector.shape_cast %31 : vector<16x128xbf16> to vector<1x16x128xbf16>
    tpu.vector_store %arg6[%c0_15, %c0_16, %c0_17], %34 {strides = array<i32>} : memref<1x16x128xbf16, #tpu.memory_space<vmem>>, vector<1x16x128xbf16>,
    return
  }
  func.func @transform_0(%arg0: i32) -> (i32, i32, i32) {
    %c0_i32 = arith.constant 0 : i32
    %c0_i32_0 = arith.constant 0 : i32
    %c0_i32_1 = arith.constant 0 : i32
    return %arg0, %c0_i32, %c0_i32_0 : i32, i32, i32
  }
  func.func @transform_1(%arg0: i32) -> (i32, i32, i32) {
    %c0_i32 = arith.constant 0 : i32
    %c0_i32_0 = arith.constant 0 : i32
    %c0_i32_1 = arith.constant 0 : i32
    return %arg0, %c0_i32, %c0_i32_0 : i32, i32, i32
  }
  func.func @transform_2(%arg0: i32) -> (i32, i32) {
    %c0_i32 = arith.constant 0 : i32
    %c0_i32_0 = arith.constant 0 : i32
    %c0_i32_1 = arith.constant 0 : i32
    return %c0_i32, %c0_i32_0 : i32, i32
  }
  func.func @transform_3(%arg0: i32) -> (i32, i32) {
    %c0_i32 = arith.constant 0 : i32
    %c0_i32_0 = arith.constant 0 : i32
    %c0_i32_1 = arith.constant 0 : i32
    return %c0_i32, %c0_i32_0 : i32, i32
  }
  func.func @transform_4(%arg0: i32) -> (i32, i32) {
    %c0_i32 = arith.constant 0 : i32
    %c0_i32_0 = arith.constant 0 : i32
    %c0_i32_1 = arith.constant 0 : i32
    return %c0_i32, %c0_i32_0 : i32, i32
  }
  func.func @transform_5(%arg0: i32) -> (i32, i32, i32) {
    %c0_i32 = arith.constant 0 : i32
    %c0_i32_0 = arith.constant 0 : i32
    %c0_i32_1 = arith.constant 0 : i32
    return %arg0, %c0_i32, %c0_i32_0 : i32, i32, i32
  }
}

</mosaic_0001>

<llo_original>
// kernel: tpu_custom_call.1
$region0: #{tpu_custom_call.1}
  #allocation0 [shape = 'u32[]', space=smem, size = 0x4, offset = 0x4, fixed_abs, tag = 'smem constant byte address 0x4 - core index']
  #allocation1 [shape = 'u32[144,128]{1,0:T(1,128)}', space=vmem, size = 0x12000, scoped, tag = 'internal scratch']
  %s0 = inlined_call_operand.hbm [shape: f32[2,16,128], index: 0, kind: input, shape index: {}]
  %s1 = inlined_call_operand.hbm [shape: f32[2,16,128], index: 1, kind: input, shape index: {}]
  %s2 = inlined_call_operand.hbm [shape: f32[16,128], index: 2, kind: input, shape index: {}]
  %s3 = inlined_call_operand.vmem [shape: f32[1,128], index: 3, kind: input, shape index: {}]
  %s4 = inlined_call_operand.vmem [shape: f32[1,128], index: 4, kind: input, shape index: {}]
  %s5 = inlined_call_operand.hbm [shape: bf16[2,16,128], index: 5, kind: output, shape index: {}]
  %s6 = sld [smem:[#allocation0]]
  $region65: #{tpu_custom_call.1} parent=0
    _
  %s8 = ssub.s32 1, %s6
  %s9 = scalar_select 0, %s8, %s6
  $region1: #{tpu_custom_call.1} parent=0
    #allocation2 [shape = 'u8[16384]{0}', space=vmem, size = 0x4000, scoped, tag = 'input window, operand 0']
    #allocation3 [shape = 's32[2]{0}', space=sflag, size = 0x8, scoped, tag = 'scoped memory for tpu_custom_call.1']
    #allocation4 [shape = 's32[2]{0}', space=sflag, size = 0x8, scoped, tag = 'scoped memory for tpu_custom_call.1']
    #allocation5 [shape = 'u8[16384]{0}', space=vmem, size = 0x4000, scoped, tag = 'input window, operand 1']
    #allocation6 [shape = 's32[2]{0}', space=sflag, size = 0x8, scoped, tag = 'scoped memory for tpu_custom_call.1']
    #allocation7 [shape = 'u8[8192]{0}', space=vmem, size = 0x2000, scoped, tag = 'input window, operand 2, single buffered']
    #allocation8 [shape = 'u8[8192]{0}', space=vmem, size = 0x2000, scoped, tag = 'output window, operand 0']
    %10 = vsyncpa [#allocation3], 0
    %s11 = scalar_lea.sflag [#allocation3], 1
    %12 = vsyncpa %s11, 0
    %13 = vsyncpa [#allocation6], 0
    %s14 = scalar_lea.sflag [#allocation6], 1
    %15 = vsyncpa %s14, 0
    %16 = vsyncpa [#allocation4], 0
    %s17 = scalar_lea.sflag [#allocation4], 1
    %18 = vsyncpa %s17, 0
    loop: start=0, step=1, limit=4
    $region2: #{tpu_custom_call.1} parent=1 // loop_pre_header
      _
    $region3: #{tpu_custom_call.1} parent=1 // loop_header
      %s20 = sphi 0, %s24
      %p21 = scmp.ge.s32.totalorder %s20, 4
      %s30 = sphi 0, %s32
      %s33 = sphi 0, %s30
      %s34 = sphi 0, %s33
      %s50 = sphi 0, %s34
      %s56 = sphi 0, %s58
      %s59 = sphi 0, %s56
      %s60 = sphi 0, %s59
      %s76 = sphi 0, %s60
      %s80 = sphi 0, %s80
      %s82 = sphi 0, %s80
      %s83 = sphi 0, %s82
      %s97 = sphi 0, %s83
      %s101 = sphi 0, %s101
      %s103 = sphi 0, %s101
      %s104 = sphi 0, %s103
      %s118 = sphi 0, %s104
      %s122 = sphi 0, %s122
      %s124 = sphi 0, %s122
      %s125 = sphi 0, %s124
      %s139 = sphi 0, %s125
      %s145 = sphi 0, %s147
      %s148 = sphi 0, %s145
      %s149 = sphi 0, %s148
      %s165 = sphi 0, %s149
    $region4: #{tpu_custom_call.1} parent=1 // loop_header_branch
      %23 = sbr.rel (%p21) target = $region8
    $region5: #{tpu_custom_call.1} parent=1 // loop_body
      %s25 = ssub.s32 %s20, 1
      %s26 = ssub.s32 %s20, 2
      %s27 = sadd.s32 %s20, 1
      %s28 = ssub.s32 %s20, %s27
      %p29 = scmp.eq.s32.totalorder %s28, 0
      %s31 = sadd.s32 %s30, 1
      %s32 = scalar_select %p29, %s30, %s31
      %p35 = pneg %p29
      %p36 = scmp.eq.s32.totalorder %s20, 1
      %p37 = por %p35, %p36
      %p38 = scmp.ne.s32.totalorder %s30, %s33
      %p39 = scmp.eq.s32.totalorder %s20, 0
      %p40 = por %p38, %p39
      %p41 = scmp.ne.s32.totalorder %s30, %s33
      %p42 = scmp.eq.s32.totalorder %s25, 1
      %p43 = por %p41, %p42
      %p44 = scmp.ne.s32.totalorder %s33, %s34
      %p45 = scmp.eq.s32.totalorder %s25, 0
      %p46 = por %p44, %p45
      %p47 = scmp.ne.s32.totalorder %s33, %s34
      %p48 = scmp.eq.s32.totalorder %s26, 1
      %p49 = por %p47, %p48
      %p51 = scmp.ne.s32.totalorder %s34, %s50
      %p52 = scmp.eq.s32.totalorder %s26, 0
      %p53 = por %p51, %p52
      %s54 = ssub.s32 %s20, %s27
      %p55 = scmp.eq.s32.totalorder %s54, 0
      %s57 = sadd.s32 %s56, 1
      %s58 = scalar_select %p55, %s56, %s57
      %p61 = pneg %p55
      %p62 = scmp.eq.s32.totalorder %s20, 1
      %p63 = por %p61, %p62
      %p64 = scmp.ne.s32.totalorder %s56, %s59
      %p65 = scmp.eq.s32.totalorder %s20, 0
      %p66 = por %p64, %p65
      %p67 = scmp.ne.s32.totalorder %s56, %s59
      %p68 = scmp.eq.s32.totalorder %s25, 1
      %p69 = por %p67, %p68
      %p70 = scmp.ne.s32.totalorder %s59, %s60
      %p71 = scmp.eq.s32.totalorder %s25, 0
      %p72 = por %p70, %p71
      %p73 = scmp.ne.s32.totalorder %s59, %s60
      %p74 = scmp.eq.s32.totalorder %s26, 1
      %p75 = por %p73, %p74
      %p77 = scmp.ne.s32.totalorder %s60, %s76
      %p78 = scmp.eq.s32.totalorder %s26, 0
      %p79 = por %p77, %p78
      %s81 = sadd.s32 %s80, 1
      %p84 = scmp.eq.s32.totalorder %s20, 1
      %p85 = scmp.ne.s32.totalorder %s80, %s82
      %p86 = scmp.eq.s32.totalorder %s20, 0
      %p87 = por %p85, %p86
      %p88 = scmp.ne.s32.totalorder %s80, %s82
      %p89 = scmp.eq.s32.totalorder %s25, 1
      %p90 = por %p88, %p89
      %p91 = scmp.ne.s32.totalorder %s82, %s83
      %p92 = scmp.eq.s32.totalorder %s25, 0
      %p93 = por %p91, %p92
      %p94 = scmp.ne.s32.totalorder %s82, %s83
      %p95 = scmp.eq.s32.totalorder %s26, 1
      %p96 = por %p94, %p95
      %p98 = scmp.ne.s32.totalorder %s83, %s97
      %p99 = scmp.eq.s32.totalorder %s26, 0
      %p100 = por %p98, %p99
      %s102 = sadd.s32 %s101, 1
      %p105 = scmp.eq.s32.totalorder %s20, 1
      %p106 = scmp.ne.s32.totalorder %s101, %s103
      %p107 = scmp.eq.s32.totalorder %s20, 0
      %p108 = por %p106, %p107
      %p109 = scmp.ne.s32.totalorder %s101, %s103
      %p110 = scmp.eq.s32.totalorder %s25, 1
      %p111 = por %p109, %p110
      %p112 = scmp.ne.s32.totalorder %s103, %s104
      %p113 = scmp.eq.s32.totalorder %s25, 0
      %p114 = por %p112, %p113
      %p115 = scmp.ne.s32.totalorder %s103, %s104
      %p116 = scmp.eq.s32.totalorder %s26, 1
      %p117 = por %p115, %p116
      %p119 = scmp.ne.s32.totalorder %s104, %s118
      %p120 = scmp.eq.s32.totalorder %s26, 0
      %p121 = por %p119, %p120
      %s123 = sadd.s32 %s122, 1
      %p126 = scmp.eq.s32.totalorder %s20, 1
      %p127 = scmp.ne.s32.totalorder %s122, %s124
      %p128 = scmp.eq.s32.totalorder %s20, 0
      %p129 = por %p127, %p128
      %p130 = scmp.ne.s32.totalorder %s122, %s124
      %p131 = scmp.eq.s32.totalorder %s25, 1
      %p132 = por %p130, %p131
      %p133 = scmp.ne.s32.totalorder %s124, %s125
      %p134 = scmp.eq.s32.totalorder %s25, 0
      %p135 = por %p133, %p134
      %p136 = scmp.ne.s32.totalorder %s124, %s125
      %p137 = scmp.eq.s32.totalorder %s26, 1
      %p138 = por %p136, %p137
      %p140 = scmp.ne.s32.totalorder %s125, %s139
      %p141 = scmp.eq.s32.totalorder %s26, 0
      %p142 = por %p140, %p141
      %s143 = ssub.s32 %s20, %s27
      %p144 = scmp.eq.s32.totalorder %s143, 0
      %s146 = sadd.s32 %s145, 1
      %s147 = scalar_select %p144, %s145, %s146
      %p150 = pneg %p144
      %p151 = scmp.eq.s32.totalorder %s20, 1
      %p152 = por %p150, %p151
      %p153 = scmp.ne.s32.totalorder %s145, %s148
      %p154 = scmp.eq.s32.totalorder %s20, 0
      %p155 = por %p153, %p154
      %p156 = scmp.ne.s32.totalorder %s145, %s148
      %p157 = scmp.eq.s32.totalorder %s25, 1
      %p158 = por %p156, %p157
      %p159 = scmp.ne.s32.totalorder %s148, %s149
      %p160 = scmp.eq.s32.totalorder %s25, 0
      %p161 = por %p159, %p160
      %p162 = scmp.ne.s32.totalorder %s148, %s149
      %p163 = scmp.eq.s32.totalorder %s26, 1
      %p164 = por %p162, %p163
      %p166 = scmp.ne.s32.totalorder %s149, %s165
      %p167 = scmp.eq.s32.totalorder %s26, 0
      %p168 = por %p166, %p167
      %p169 = scmp.le.s32.totalorder 1, %s20
      %p170 = scmp.lt.s32.totalorder %s20, 3
      %p171 = pnand %p169, %p170
      %p172 = pneg %p171
      // Predicated region
      $region9: #{tpu_custom_call.1} parent=5 // pred_check
        _
      $region10: #{tpu_custom_call.1} parent=5 // pred_check_branch
        %174 = sbr.rel (%p171) target = $region12
      $region11: #{tpu_custom_call.1} parent=5 // pred_region
        %s175 = ssub.s32 %s20, 1
        // Predicated region
        $region13: #{tpu_custom_call.1} parent=11 // pred_check
          %p176 = pneg %p93
        $region14: #{tpu_custom_call.1} parent=11 // pred_check_branch
          %178 = sbr.rel (%p176) target = $region16
        $region15: #{tpu_custom_call.1} parent=11 // pred_region
          %s180 = ssub.s32 256, 256
          %181 = vsyncadd [#allocation6], %s180
          %s182 = sshll.u32 [#allocation7], 4
          %s183 = int_to_ptr.vmem [resolvable:$true] %s182
          %188 = dma.hbm_to_vmem [thread:$0]  %s2, 256, %s183, [#allocation6], 128, 128, 8
        $region16: #{tpu_custom_call.1} parent=11 // pred_fallthru
          _
        // Predicated region
        $region17: #{tpu_custom_call.1} parent=11 // pred_check
          %p189 = pneg %p114
        $region18: #{tpu_custom_call.1} parent=11 // pred_check_branch
          %191 = sbr.rel (%p189) target = $region20
        $region19: #{tpu_custom_call.1} parent=11 // pred_region
          _
        $region20: #{tpu_custom_call.1} parent=11 // pred_fallthru
          _
        // Predicated region
        $region21: #{tpu_custom_call.1} parent=11 // pred_check
          %p192 = pneg %p135
        $region22: #{tpu_custom_call.1} parent=11 // pred_check_branch
          %194 = sbr.rel (%p192) target = $region24
        $region23: #{tpu_custom_call.1} parent=11 // pred_region
          _
        $region24: #{tpu_custom_call.1} parent=11 // pred_fallthru
          _
      $region12: #{tpu_custom_call.1} parent=5 // pred_fallthru
        _
      %p195 = scmp.lt.s32.totalorder %s20, 2
      // Predicated region
      $region25: #{tpu_custom_call.1} parent=5 // pred_check
        %p196 = pneg %p195
      $region26: #{tpu_custom_call.1} parent=5 // pred_check_branch
        %198 = sbr.rel (%p196) target = $region28
      $region27: #{tpu_custom_call.1} parent=5 // pred_region
        // Predicated region
        $region29: #{tpu_custom_call.1} parent=27 // pred_check
          %p199 = pneg %p40
        $region30: #{tpu_custom_call.1} parent=27 // pred_check_branch
          %201 = sbr.rel (%p199) target = $region32
        $region31: #{tpu_custom_call.1} parent=27 // pred_region
          %s202 = sand.u32 %s30, 1
          %s203 = scalar_lea.sflag [#allocation3], %s202
          %s204 = sand.u32 %s30, 1
          %s205 = smul.addr %s204, 16
          %s206 = scalar_lea.vmem [#allocation2], %s205
          %s208 = ssub.s32 256, 256
          %209 = vsyncadd %s203, %s208
          %s210 = smul.addr %s20, 2
          %s211 = smul.addr %s210, 128
          %s212 = scalar_lea.hbm %s0, %s211
          %s213 = sshll.u32 %s206, 4
          %s214 = int_to_ptr.vmem [resolvable:$true] %s213
          %219 = dma.hbm_to_vmem [thread:$0]  %s212, 256, %s214, %s203, 128, 128, 8
        $region32: #{tpu_custom_call.1} parent=27 // pred_fallthru
          _
        // Predicated region
        $region33: #{tpu_custom_call.1} parent=27 // pred_check
          %p220 = pneg %p66
        $region34: #{tpu_custom_call.1} parent=27 // pred_check_branch
          %222 = sbr.rel (%p220) target = $region36
        $region35: #{tpu_custom_call.1} parent=27 // pred_region
          %s223 = sand.u32 %s20, 1
          %s224 = scalar_lea.sflag [#allocation6], %s223
          %s225 = sand.u32 %s56, 1
          %s226 = smul.addr %s225, 16
          %s227 = scalar_lea.vmem [#allocation5], %s226
          %s229 = ssub.s32 256, 256
          %230 = vsyncadd %s224, %s229
          %s231 = smul.addr %s20, 2
          %s232 = smul.addr %s231, 128
          %s233 = scalar_lea.hbm %s1, %s232
          %s234 = sshll.u32 %s227, 4
          %s235 = int_to_ptr.vmem [resolvable:$true] %s234
          %240 = dma.hbm_to_vmem [thread:$0]  %s233, 256, %s235, %s224, 128, 128, 8
        $region36: #{tpu_custom_call.1} parent=27 // pred_fallthru
          _
      $region28: #{tpu_custom_call.1} parent=5 // pred_fallthru
        _
      %p241 = scmp.le.s32.totalorder 1, %s20
      %p242 = scmp.lt.s32.totalorder %s20, 3
      %p243 = pnand %p241, %p242
      %p244 = pneg %p243
      // Predicated region
      $region37: #{tpu_custom_call.1} parent=5 // pred_check
        _
      $region38: #{tpu_custom_call.1} parent=5 // pred_check_branch
        %246 = sbr.rel (%p243) target = $region40
      $region39: #{tpu_custom_call.1} parent=5 // pred_region
        %s247 = ssub.s32 %s20, 1
        %s248 = sand.u32 %s33, 1
        %s249 = scalar_lea.sflag [#allocation3], %s248
        %s250 = sand.u32 %s33, 1
        %s251 = smul.addr %s250, 16
        %s252 = scalar_lea.vmem [#allocation2], %s251
        // Predicated region
        $region41: #{tpu_custom_call.1} parent=39 // pred_check
          %p253 = pneg %p46
        $region42: #{tpu_custom_call.1} parent=39 // pred_check_branch
          %255 = sbr.rel (%p253) target = $region44
        $region43: #{tpu_custom_call.1} parent=39 // pred_region
          %256 = dma.done %s249, 256
        $region44: #{tpu_custom_call.1} parent=39 // pred_fallthru
          _
        %s257 = sand.u32 %s25, 1
        %s258 = scalar_lea.sflag [#allocation6], %s257
        %s259 = sand.u32 %s59, 1
        %s260 = smul.addr %s259, 16
        %s261 = scalar_lea.vmem [#allocation5], %s260
        // Predicated region
        $region45: #{tpu_custom_call.1} parent=39 // pred_check
          %p262 = pneg %p72
        $region46: #{tpu_custom_call.1} parent=39 // pred_check_branch
          %264 = sbr.rel (%p262) target = $region48
        $region47: #{tpu_custom_call.1} parent=39 // pred_region
          %265 = dma.done %s258, 256
        $region48: #{tpu_custom_call.1} parent=39 // pred_fallthru
          _
        // Predicated region
        $region49: #{tpu_custom_call.1} parent=39 // pred_check
          %p266 = pneg %p93
        $region50: #{tpu_custom_call.1} parent=39 // pred_check_branch
          %268 = sbr.rel (%p266) target = $region52
        $region51: #{tpu_custom_call.1} parent=39 // pred_region
          %269 = dma.done [#allocation6], 256
        $region52: #{tpu_custom_call.1} parent=39 // pred_fallthru
          _
        %s270 = sand.u32 %s33, 1
        %s271 = scalar_lea.sflag [#allocation3], %s270
        %s272 = sand.u32 %s33, 1
        %s273 = smul.addr %s272, 16
        %s274 = scalar_lea.vmem [#allocation2], %s273
        %p275 = pneg %p46
        %p276 = pneg %p43
        %s277 = sand.u32 %s25, 1
        %s278 = scalar_lea.sflag [#allocation6], %s277
        %s279 = sand.u32 %s59, 1
        %s280 = smul.addr %s279, 16
        %s281 = scalar_lea.vmem [#allocation5], %s280
        %p282 = pneg %p72
        %p283 = pneg %p69
        %p284 = pneg %p93
        %p285 = pneg %p90
        %p286 = pneg %p114
        %p287 = pneg %p111
        %p288 = pneg %p135
        %p289 = pneg %p132
        %p290 = pneg %p161
        %p291 = pneg %p158
        %s292 = sand.u32 %s148, 1
        %s293 = scalar_lea.sflag [#allocation4], %s292
        %s294 = sand.u32 %s148, 1
        %s295 = smul.addr %s294, 8
        %s296 = scalar_lea.vmem [#allocation8], %s295
        %v297 = vld [vmem:[%s252] sm:$0xff]
        %v298 = vld [vmem:[%s252 + $0x8] sm:$0xff]
        %v299 = vld [vmem:[%s261] sm:$0xff]
        %v300 = vld [vmem:[%s261 + $0x8] sm:$0xff]
        %v301 = vadd.f32 %v297, %v299
        %v302 = vadd.f32 %v298, %v300
        %v303 = vld [vmem:[#allocation7] sm:$0xff]
        %v304 = vld [vmem:[#allocation7 + $0x8] sm:$0xff]
        %v305 = vadd.f32 %v301, %v303
        %v306 = vadd.f32 %v302, %v304
        %v307 = vld [vmem:[%s3] sm:$0x1]
        %v308 = vld [vmem:[%s4] sm:$0x1]
        %309 = vadd.xlane.f32.xlu0 %v305
        %v310 = vpop.xlane.xlu0 %309
        %311 = vadd.xlane.f32.xlu0 %v306
        %v312 = vpop.xlane.xlu0 %311
        %v313 = vrcp.pop 128.0
        %v314 = vmul.f32 %v310, %v313
        %v315 = vmul.f32 %v312, %v313
        %v316 = vsub.f32 %v305, %v314
        %v317 = vsub.f32 %v306, %v315
        %v318 = vmul.f32 %v316, %v316
        %v319 = vmul.f32 %v317, %v317
        %320 = vadd.xlane.f32.xlu0 %v318
        %v321 = vpop.xlane.xlu0 %320
        %322 = vadd.xlane.f32.xlu0 %v319
        %v323 = vpop.xlane.xlu0 %322
        %v324 = vmul.f32 %v321, %v313
        %v325 = vmul.f32 %v323, %v313
        %v326 = vadd.f32 %v324, 1e-12
        %v327 = vadd.f32 %v325, 1e-12
        %v328 = vrsqrt.pop %v326
        %v329 = vrsqrt.pop %v327
        %v330 = vmul.f32 %v316, %v328
        %v331 = vmul.f32 %v317, %v329
        %v333 = vlaneseq
        %v334 = vshrl.u32 %v333, 7
        %v335 = vsub.s32 0, %v334
        %v336 = vrot.slane %v307, %v335
        %v338 = vmul.f32 %v330, %v336
        %v339 = vmul.f32 %v331, %v336
        %v341 = vlaneseq
        %v342 = vshrl.u32 %v341, 7
        %v343 = vsub.s32 0, %v342
        %v344 = vrot.slane %v308, %v343
        %v346 = vadd.f32 %v338, %v344
        %v347 = vadd.f32 %v339, %v344
        %v348 = vpack.c.bf16 %v347, %v346
        %v350 = vunpack.c.l.b16 %v348
        %v351 = vunpack.c.h.b16 %v348
        %v352 = vpack.c.b16 %v350, %v350
        %v353 = vpack.c.b16 %v351, %v351
        %356 = vst [vmem:[%s296] sm:$0xf] %v352
        %357 = vst [vmem:[%s296 + $0x4] sm:$0xf] %v353
        %s358 = sand.u32 %s148, 1
        %s359 = scalar_lea.sflag [#allocation4], %s358
        %s360 = sand.u32 %s148, 1
        %s361 = smul.addr %s360, 8
        %s362 = scalar_lea.vmem [#allocation8], %s361
        // Predicated region
        $region53: #{tpu_custom_call.1} parent=39 // pred_check
          %p363 = pneg %p158
        $region54: #{tpu_custom_call.1} parent=39 // pred_check_branch
          %365 = sbr.rel (%p363) target = $region56
        $region55: #{tpu_custom_call.1} parent=39 // pred_region
          %s367 = ssub.s32 128, 128
          %368 = vsyncadd %s359, %s367
          %s369 = smul.addr %s25, 2
          %s370 = smul.addr %s369, 64
          %s371 = scalar_lea.hbm %s5, %s370
          %s372 = sshll.u32 %s362, 4
          %s373 = int_to_ptr.vmem [resolvable:$true] %s372
          %378 = dma.vmem_to_hbm [thread:$0]  %s373, 128, %s371, %s359, 64, 64, 4
        $region56: #{tpu_custom_call.1} parent=39 // pred_fallthru
          _
      $region40: #{tpu_custom_call.1} parent=5 // pred_fallthru
        _
      %p379 = scmp.le.s32.totalorder 2, %s20
      // Predicated region
      $region57: #{tpu_custom_call.1} parent=5 // pred_check
        %p380 = pneg %p379
      $region58: #{tpu_custom_call.1} parent=5 // pred_check_branch
        %382 = sbr.rel (%p380) target = $region60
      $region59: #{tpu_custom_call.1} parent=5 // pred_region
        %s383 = ssub.s32 %s20, 2
        // Predicated region
        $region61: #{tpu_custom_call.1} parent=59 // pred_check
          %p384 = pneg %p164
        $region62: #{tpu_custom_call.1} parent=59 // pred_check_branch
          %386 = sbr.rel (%p384) target = $region64
        $region63: #{tpu_custom_call.1} parent=59 // pred_region
          %s387 = sand.u32 %s149, 1
          %s388 = scalar_lea.sflag [#allocation4], %s387
          %s389 = sand.u32 %s149, 1
          %s390 = smul.addr %s389, 8
          %s391 = scalar_lea.vmem [#allocation8], %s390
          %392 = dma.done %s388, 128
        $region64: #{tpu_custom_call.1} parent=59 // pred_fallthru
          _
      $region60: #{tpu_custom_call.1} parent=5 // pred_fallthru
        _
    $region6: #{tpu_custom_call.1} parent=1 // loop_footer
      %s24 = sadd.s32 1, %s20
    $region7: #{tpu_custom_call.1} parent=1 // loop_footer_branch
      %19 = sbr.rel target = $region3
    $region8: #{tpu_custom_call.1} parent=1 // loop_exit
      _
    %393 = vsyncpa [#allocation3], 1
    %s394 = scalar_lea.sflag [#allocation3], 1
    %395 = vsyncpa %s394, 1
    %396 = vsyncpa [#allocation6], 1
    %s397 = scalar_lea.sflag [#allocation6], 1
    %398 = vsyncpa %s397, 1
    %399 = vsyncpa [#allocation4], 1
    %s400 = scalar_lea.sflag [#allocation4], 1
    %401 = vsyncpa %s400, 1

</llo_original>
